<compile_context>
chip_gen: v5e
topology: v5e:2x2
jax: 0.10.0
libtpu: 0.0.40
codegen_flags: <defaults>
</compile_context>

<pallas_src>
import jax
import jax.numpy as jnp
from jax.experimental import pallas as pl
from jax.experimental.pallas import tpu as pltpu

IN_DIM = 256
HID_DIM = 128
LENGTH = 128  # module's `length`; 128 keeps the (L, L) output lane-dense


def _tg_adapter2_kernel(x_ref, c_ref, w_ref, o_ref):
    """One sample per grid step.

    x_ref: (1, 1, IN)            f32   per-sample input row
    c_ref: (1, HID + 2*Lp)       f32   [b1 | b2 (padded) | relu(p) (padded)]
    w_ref: (IN + HID, >=Lp)      bf16  [W1^T ; W2^T] merged, lane-dense
    o_ref: (1, Lp, Lp)           f32   per-sample output block
    """
    Lp = o_ref.shape[-1]

    x_row = x_ref[0]                                    # (1, IN) f32
    b1 = c_ref[:, :HID_DIM]                             # (1, HID) f32
    b2 = c_ref[:, HID_DIM:HID_DIM + Lp]                 # (1, Lp)  f32
    p_pos = c_ref[:, HID_DIM + Lp:HID_DIM + 2 * Lp]     # (1, Lp)  f32, relu folded

    # Static, tile-aligned views into the merged bf16 weight buffer.
    w1_t = w_ref[:IN_DIM, :HID_DIM]                     # (IN, HID) bf16
    w2_t = w_ref[IN_DIM:IN_DIM + HID_DIM, :Lp]          # (HID, Lp) bf16

    # Layer 1: h = relu(x @ W1^T + b1); bf16 at the MXU inputs, f32 accumulate.
    h = jnp.dot(x_row.astype(jnp.bfloat16), w1_t,
                preferred_element_type=jnp.float32)
    h = jnp.maximum(h + b1, 0.0)                        # (1, HID) f32 VPU

    # Layer 2: y = relu(h @ W2^T + b2)
    y = jnp.dot(h.astype(jnp.bfloat16), w2_t,
                preferred_element_type=jnp.float32)
    y = jnp.maximum(y + b2, 0.0)                        # (1, Lp) f32, y >= 0

    # Single lane->sublane transpose (XLU); then a pure-VPU f32 outer product.
    y_col = jnp.transpose(y)                            # (Lp, 1)
    o_ref[0] = y_col * p_pos                            # (Lp,1)*(1,Lp) -> (Lp,Lp)


def tg_adapter2_prepare_params(w1, b1, w2, b2, outer_param):
    """One-time parameter packing (do this at init, NOT per forward call)."""
    L = int(w2.shape[0])
    Lp = ((L + 127) // 128) * 128          # pad to lane-dense width
    lanes = max(HID_DIM, Lp)

    w1_t = jnp.asarray(w1, jnp.float32).T.astype(jnp.bfloat16)   # (IN, HID)
    w2_t = jnp.asarray(w2, jnp.float32).T.astype(jnp.bfloat16)   # (HID, L)
    w_merged = jnp.zeros((IN_DIM + HID_DIM, lanes), jnp.bfloat16)
    w_merged = w_merged.at[:IN_DIM, :HID_DIM].set(w1_t)
    w_merged = w_merged.at[IN_DIM:, :L].set(w2_t)

    # relu folded into p here: y >= 0 after its own ReLU, so
    # relu(outer(y, p)) == outer(y, relu(p)).
    p_pos = jnp.maximum(jnp.asarray(outer_param, jnp.float32).reshape(L), 0.0)
    consts = jnp.zeros((1, HID_DIM + 2 * Lp), jnp.float32)
    consts = consts.at[0, :HID_DIM].set(jnp.asarray(b1, jnp.float32).reshape(HID_DIM))
    consts = consts.at[0, HID_DIM:HID_DIM + L].set(jnp.asarray(b2, jnp.float32).reshape(L))
    consts = consts.at[0, HID_DIM + Lp:HID_DIM + Lp + L].set(p_pos)

    return {"w": w_merged, "consts": consts, "L": L, "Lp": Lp}


def tg_adapter2_apply(x_rows, params):
    """Batched entry point: x_rows (B, IN_DIM) f32 -> (B, L, L) f32."""
    w_merged, consts = params["w"], params["consts"]
    L, Lp = params["L"], params["Lp"]
    B = x_rows.shape[0]
    x3 = jnp.asarray(x_rows, jnp.float32).reshape(B, 1, IN_DIM)

    out = pl.pallas_call(
        _tg_adapter2_kernel,
        out_shape=jax.ShapeDtypeStruct((B, Lp, Lp), jnp.float32),
        grid=(B,),
        in_specs=[
            pl.BlockSpec((1, 1, IN_DIM), lambda b: (b, 0, 0)),   # per-sample x row
            pl.BlockSpec(consts.shape, lambda b: (0, 0)),        # VMEM-resident consts
            pl.BlockSpec(w_merged.shape, lambda b: (0, 0)),      # VMEM-resident bf16 weights
        ],
        out_specs=pl.BlockSpec((1, Lp, Lp), lambda b: (b, 0, 0)),
        compiler_params=pltpu.CompilerParams(
            dimension_semantics=("parallel",)),                  # v7x: 2 TensorCores
    )(x3, consts, w_merged)

    if Lp != L:
        out = out[:, :L, :L]
    return out


def tg_adapter2_forward(x, params):
    """Module-faithful forward: x (1, IN_DIM) -> (1, 1, L, L)."""
    L = params["L"]
    out = tg_adapter2_apply(x.reshape(1, IN_DIM), params)
    return out.reshape(1, 1, L, L)


# ----------------------------- references ---------------------------------

def _reference_f32(x, w1, b1, w2, b2, p):
    """Pure-f32 module semantics (x may be batched: (B, IN))."""
    h = jnp.maximum(x @ w1.T + b1, 0.0)
    y = jnp.maximum(h @ w2.T + b2, 0.0)
    return jnp.maximum(y[:, :, None] * p[None, None, :], 0.0)   # (B, L, L)


def _reference_bf16(x, w1, b1, w2, b2, p):
    """Emulates the kernel's bf16 dot inputs with f32 accumulation."""
    h = jnp.dot(x.astype(jnp.bfloat16), w1.T.astype(jnp.bfloat16),
                preferred_element_type=jnp.float32)
    h = jnp.maximum(h + b1, 0.0)
    y = jnp.dot(h.astype(jnp.bfloat16), w2.T.astype(jnp.bfloat16),
                preferred_element_type=jnp.float32)
    y = jnp.maximum(y + b2, 0.0)
    return jnp.maximum(y[:, :, None] * p[None, None, :], 0.0)   # (B, L, L)


if __name__ == "__main__":
    key = jax.random.PRNGKey(0)
    kx, k1, k2, k3, k4, k5, kb = jax.random.split(key, 7)

    # Deterministic synthetic inputs in native nn.Linear / nn.Parameter layouts.
    x = jax.random.normal(kx, (1, IN_DIM), dtype=jnp.float32)
    w1 = jax.random.normal(k1, (HID_DIM, IN_DIM), dtype=jnp.float32) * 0.05
    b1 = jax.random.normal(k2, (HID_DIM,), dtype=jnp.float32) * 0.05
    w2 = jax.random.normal(k3, (LENGTH, HID_DIM), dtype=jnp.float32) * 0.05
    b2 = jax.random.normal(k4, (LENGTH,), dtype=jnp.float32) * 0.05
    outer_param = jax.random.normal(k5, (LENGTH,), dtype=jnp.float32)

    # One-time parameter packing (persisted bf16 / merged / pre-transposed).
    params = tg_adapter2_prepare_params(w1, b1, w2, b2, outer_param)

    # ---- module-faithful single-sample forward (B = 1) ----
    out = jax.block_until_ready(tg_adapter2_forward(x, params))
    assert out.shape == (1, 1, LENGTH, LENGTH), out.shape

    ref_bf = _reference_bf16(x, w1, b1, w2, b2, outer_param).reshape(1, 1, LENGTH, LENGTH)
    assert jnp.allclose(out, ref_bf, atol=2e-3, rtol=2e-3), \
        float(jnp.max(jnp.abs(out - ref_bf)))

    ref_f32 = _reference_f32(x, w1, b1, w2, b2, outer_param).reshape(1, 1, LENGTH, LENGTH)
    assert jnp.allclose(out, ref_f32, atol=5e-2, rtol=5e-2), \
        float(jnp.max(jnp.abs(out - ref_f32)))

    # ---- batched entry point (grid over B, "parallel" for v7x's 2 TCs) ----
    B = 4
    xb = jax.random.normal(kb, (B, IN_DIM), dtype=jnp.float32)
    outb = jax.block_until_ready(tg_adapter2_apply(xb, params))
    assert outb.shape == (B, LENGTH, LENGTH), outb.shape
    refb = _reference_bf16(xb, w1, b1, w2, b2, outer_param)
    assert jnp.allclose(outb, refb, atol=2e-3, rtol=2e-3), \
        float(jnp.max(jnp.abs(outb - refb)))

    print("KERNEL_OK")
</pallas_src>

<mosaic_0001>
module attributes {stable_mosaic.version = 11 : i64} {
  func.func @_tg_adapter2_kernel(%arg0: i32, %arg1: memref<1x1x256xf32, #tpu.memory_space<vmem>>, %arg2: memref<1x384xf32, #tpu.memory_space<vmem>>, %arg3: memref<384x128xbf16, #tpu.memory_space<vmem>>, %arg4: memref<1x128x128xf32, #tpu.memory_space<vmem>>) attributes {dimension_semantics = [#tpu.dimension_semantics<parallel>], iteration_bounds = array<i64: 1>, scalar_prefetch = 0 : i64, scratch_operands = 0 : i64, tpu.core_type = #tpu.core_type<tc>, window_params = [{transform_indices = @transform_0, window_bounds = array<i64: 1, 1, 256>}, {pipeline_mode = #tpu.pipeline_mode<synchronous>, transform_indices = @transform_1, window_bounds = array<i64: 1, 384>}, {pipeline_mode = #tpu.pipeline_mode<synchronous>, transform_indices = @transform_2, window_bounds = array<i64: 384, 128>}, {transform_indices = @transform_3, window_bounds = array<i64: 1, 128, 128>}]} {
    %c0 = arith.constant 0 : index
    %c0_0 = arith.constant 0 : index
    %c0_1 = arith.constant 0 : index
    %0 = vector.load %arg1[%c0, %c0_0, %c0_1] : memref<1x1x256xf32, #tpu.memory_space<vmem>>, vector<1x1x256xf32>
    %1 = vector.shape_cast %0 : vector<1x1x256xf32> to vector<1x256xf32>
    %c0_2 = arith.constant 0 : index
    %c0_3 = arith.constant 0 : index
    %2 = vector.load %arg2[%c0_2, %c0_3] : memref<1x384xf32, #tpu.memory_space<vmem>>, vector<1x128xf32>
    %c0_4 = arith.constant 0 : index
    %c128 = arith.constant 128 : index
    %3 = vector.load %arg2[%c0_4, %c128] : memref<1x384xf32, #tpu.memory_space<vmem>>, vector<1x128xf32>
    %c0_5 = arith.constant 0 : index
    %c256 = arith.constant 256 : index
    %4 = vector.load %arg2[%c0_5, %c256] : memref<1x384xf32, #tpu.memory_space<vmem>>, vector<1x128xf32>
    %c0_6 = arith.constant 0 : index
    %c0_7 = arith.constant 0 : index
    %5 = vector.load %arg3[%c0_6, %c0_7] : memref<384x128xbf16, #tpu.memory_space<vmem>>, vector<256x128xbf16>
    %c256_8 = arith.constant 256 : index
    %c0_9 = arith.constant 0 : index
    %6 = vector.load %arg3[%c256_8, %c0_9] : memref<384x128xbf16, #tpu.memory_space<vmem>>, vector<128x128xbf16>
    %7 = arith.truncf %1 : vector<1x256xf32> to vector<1x256xbf16>
    %cst = arith.constant dense<0.000000e+00> : vector<1x128xf32>
    %8 = tpu.matmul %7, %5, %cst {dimension_numbers = #tpu.dot_dimension_numbers<[1], [0], [0], [1], [0, 0, 1, 1], [], []>} : vector<1x256xbf16>, vector<256x128xbf16>, vector<1x128xf32> -> vector<1x128xf32>
    %9 = arith.addf %8, %2 : vector<1x128xf32>
    %cst_10 = arith.constant 0.000000e+00 : f32
    %10 = vector.broadcast %cst_10 : f32 to vector<1x128xf32>
    %11 = arith.maximumf %9, %10 : vector<1x128xf32>
    %12 = arith.truncf %11 : vector<1x128xf32> to vector<1x128xbf16>
    %cst_11 = arith.constant dense<0.000000e+00> : vector<1x128xf32>
    %13 = tpu.matmul %12, %6, %cst_11 {dimension_numbers = #tpu.dot_dimension_numbers<[1], [0], [0], [1], [0, 0, 1, 1], [], []>} : vector<1x128xbf16>, vector<128x128xbf16>, vector<1x128xf32> -> vector<1x128xf32>
    %14 = arith.addf %13, %3 : vector<1x128xf32>
    %cst_12 = arith.constant 0.000000e+00 : f32
    %15 = vector.broadcast %cst_12 : f32 to vector<1x128xf32>
    %16 = arith.maximumf %14, %15 : vector<1x128xf32>
    %17 = tpu.transpose %16, [1, 0] : vector<1x128xf32> -> vector<128x1xf32>
    %18 = vector.broadcast %17 : vector<128x1xf32> to vector<128x128xf32>
    %19 = vector.broadcast %4 : vector<1x128xf32> to vector<128x128xf32>
    %20 = arith.mulf %18, %19 : vector<128x128xf32>
    %c0_13 = arith.constant 0 : index
    %c0_14 = arith.constant 0 : index
    %c0_15 = arith.constant 0 : index
    %21 = vector.load %arg4[%c0_13, %c0_14, %c0_15] : memref<1x128x128xf32, #tpu.memory_space<vmem>>, vector<1x128x128xf32>
    %22 = vector.shape_cast %21 : vector<1x128x128xf32> to vector<128x128xf32>
    %23 = vector.shape_cast %20 : vector<128x128xf32> to vector<1x128x128xf32>
    tpu.vector_store %arg4[%c0_13, %c0_14, %c0_15], %23 {strides = array<i32>} : memref<1x128x128xf32, #tpu.memory_space<vmem>>, vector<1x128x128xf32>,
    return
  }
  func.func @transform_0(%arg0: i32) -> (i32, i32, i32) {
    %c0_i32 = arith.constant 0 : i32
    %c0_i32_0 = arith.constant 0 : i32
    %c0_i32_1 = arith.constant 0 : i32
    return %arg0, %c0_i32, %c0_i32_0 : i32, i32, i32
  }
  func.func @transform_1(%arg0: i32) -> (i32, i32) {
    %c0_i32 = arith.constant 0 : i32
    %c0_i32_0 = arith.constant 0 : i32
    %c0_i32_1 = arith.constant 0 : i32
    return %c0_i32, %c0_i32_0 : i32, i32
  }
  func.func @transform_2(%arg0: i32) -> (i32, i32) {
    %c0_i32 = arith.constant 0 : i32
    %c0_i32_0 = arith.constant 0 : i32
    %c0_i32_1 = arith.constant 0 : i32
    return %c0_i32, %c0_i32_0 : i32, i32
  }
  func.func @transform_3(%arg0: i32) -> (i32, i32, i32) {
    %c0_i32 = arith.constant 0 : i32
    %c0_i32_0 = arith.constant 0 : i32
    %c0_i32_1 = arith.constant 0 : i32
    return %arg0, %c0_i32, %c0_i32_0 : i32, i32, i32
  }
}

</mosaic_0001>

<llo_original>
// kernel: tpu_custom_call.1
$region0: #{tpu_custom_call.1}
  #allocation0 [shape = 'u32[]', space=smem, size = 0x4, offset = 0x4, fixed_abs, tag = 'smem constant byte address 0x4 - core index']
  #allocation1 [shape = 'u32[72,128]{1,0:T(1,128)}', space=vmem, size = 0x9000, scoped, tag = 'internal scratch']
  %s0 = inlined_call_operand.hbm [shape: f32[1,1,256], index: 0, kind: input, shape index: {}]
  %s1 = inlined_call_operand.hbm [shape: f32[1,384], index: 1, kind: input, shape index: {}]
  %s2 = inlined_call_operand.hbm [shape: bf16[384,128], index: 2, kind: input, shape index: {}]
  %s3 = inlined_call_operand.hbm [shape: f32[1,128,128], index: 3, kind: output, shape index: {}]
  %s4 = sld [smem:[#allocation0]]
  $region34: #{tpu_custom_call.1} parent=0
    _
  %s6 = ssub.s32 1, %s4
  %s7 = scalar_select 0, %s6, %s4
  $region1: #{tpu_custom_call.1} parent=0
    #allocation2 [shape = 'u8[1024]{0}', space=vmem, size = 0x400, scoped, tag = 'input window, operand 0, single buffered']
    #allocation3 [shape = 's32[1]{0}', space=sflag, size = 0x4, scoped, tag = 'scoped memory for tpu_custom_call.1']
    #allocation4 [shape = 's32[1]{0}', space=sflag, size = 0x4, scoped, tag = 'scoped memory for tpu_custom_call.1']
    #allocation5 [shape = 'u8[1536]{0}', space=vmem, size = 0x800, scoped, tag = 'input window, operand 1, single buffered']
    #allocation6 [shape = 's32[1]{0}', space=sflag, size = 0x4, scoped, tag = 'scoped memory for tpu_custom_call.1']
    #allocation7 [shape = 'u8[98304]{0}', space=vmem, size = 0x18000, scoped, tag = 'input window, operand 2, single buffered']
    #allocation8 [shape = 'u8[65536]{0}', space=vmem, size = 0x10000, scoped, tag = 'output window, operand 0, single buffered']
    %8 = vsyncpa [#allocation3], 0
    %9 = vsyncpa [#allocation6], 0
    %10 = vsyncpa [#allocation4], 0
    // Predicated region
    $region2: #{tpu_custom_call.1} parent=1 // pred_check
      _
    $region3: #{tpu_custom_call.1} parent=1 // pred_check_branch
      %12 = sbr.rel (0) target = $region5
    $region4: #{tpu_custom_call.1} parent=1 // pred_region
      %14 = vsyncadd [#allocation3], 0
      %s16 = sshll.u32 %s0, 4
      %s17 = int_to_ptr.hbm [resolvable:$true] %s16
      %s18 = sshll.u32 [#allocation2], 4
      %s19 = int_to_ptr.vmem [resolvable:$true] %s18
      %21 = dma.hbm_to_vmem [thread:$0]  %s17, 32, %s19, [#allocation3]
    $region5: #{tpu_custom_call.1} parent=1 // pred_fallthru
      _
    // Predicated region
    $region6: #{tpu_custom_call.1} parent=1 // pred_check
      _
    $region7: #{tpu_custom_call.1} parent=1 // pred_check_branch
      %23 = sbr.rel (0) target = $region9
    $region8: #{tpu_custom_call.1} parent=1 // pred_region
      %25 = vsyncadd [#allocation6], 0
      %s27 = sshll.u32 %s1, 4
      %s28 = int_to_ptr.hbm [resolvable:$true] %s27
      %s29 = sshll.u32 [#allocation5], 4
      %s30 = int_to_ptr.vmem [resolvable:$true] %s29
      %32 = dma.hbm_to_vmem [thread:$0]  %s28, 48, %s30, [#allocation6]
    $region9: #{tpu_custom_call.1} parent=1 // pred_fallthru
      _
    // Predicated region
    $region10: #{tpu_custom_call.1} parent=1 // pred_check
      _
    $region11: #{tpu_custom_call.1} parent=1 // pred_check_branch
      %34 = sbr.rel (0) target = $region13
    $region12: #{tpu_custom_call.1} parent=1 // pred_region
      %36 = vsyncadd [#allocation6], 0
      %s37 = sshll.u32 %s2, 4
      %s38 = int_to_ptr.hbm [resolvable:$true] %s37
      %s39 = sshll.u32 [#allocation7], 4
      %s40 = int_to_ptr.vmem [resolvable:$true] %s39
      %45 = dma.hbm_to_vmem [thread:$0]  %s38, 3072, %s40, [#allocation6], 64, 64, 4
    $region13: #{tpu_custom_call.1} parent=1 // pred_fallthru
      _
    // Predicated region
    $region14: #{tpu_custom_call.1} parent=1 // pred_check
      _
    $region15: #{tpu_custom_call.1} parent=1 // pred_check_branch
      %47 = sbr.rel (0) target = $region17
    $region16: #{tpu_custom_call.1} parent=1 // pred_region
      %49 = dma.done [#allocation3], 32
    $region17: #{tpu_custom_call.1} parent=1 // pred_fallthru
      _
    // Predicated region
    $region18: #{tpu_custom_call.1} parent=1 // pred_check
      _
    $region19: #{tpu_custom_call.1} parent=1 // pred_check_branch
      %51 = sbr.rel (0) target = $region21
    $region20: #{tpu_custom_call.1} parent=1 // pred_region
      %53 = dma.done [#allocation6], 48
    $region21: #{tpu_custom_call.1} parent=1 // pred_fallthru
      _
    // Predicated region
    $region22: #{tpu_custom_call.1} parent=1 // pred_check
      _
    $region23: #{tpu_custom_call.1} parent=1 // pred_check_branch
      %55 = sbr.rel (0) target = $region25
    $region24: #{tpu_custom_call.1} parent=1 // pred_region
      %57 = dma.done [#allocation6], 3072
    $region25: #{tpu_custom_call.1} parent=1 // pred_fallthru
      _
    %v58 = vld [vmem:[#allocation2] sm:$0x3]
    %v59 = vld [vmem:[#allocation5] sm:$0x1]
    %v60 = vld [vmem:[#allocation5 + $0x1] sm:$0x1]
    %v61 = vld [vmem:[#allocation5 + $0x2] sm:$0x1]
    %v62 = vld [vmem:[#allocation7] sm:$0xf]
    %v63 = vld [vmem:[#allocation7 + $0x4] sm:$0xf]
    %v64 = vld [vmem:[#allocation7 + $0x8] sm:$0xf]
    %v65 = vld [vmem:[#allocation7 + $0xc] sm:$0xf]
    %v66 = vld [vmem:[#allocation7 + $0x10] sm:$0xf]
    %v67 = vld [vmem:[#allocation7 + $0x14] sm:$0xf]
    %v68 = vld [vmem:[#allocation7 + $0x18] sm:$0xf]
    %v69 = vld [vmem:[#allocation7 + $0x1c] sm:$0xf]
    %v70 = vld [vmem:[#allocation7 + $0x20] sm:$0xf]
    %v71 = vld [vmem:[#allocation7 + $0x24] sm:$0xf]
    %v72 = vld [vmem:[#allocation7 + $0x28] sm:$0xf]
    %v73 = vld [vmem:[#allocation7 + $0x2c] sm:$0xf]
    %v74 = vld [vmem:[#allocation7 + $0x30] sm:$0xf]
    %v75 = vld [vmem:[#allocation7 + $0x34] sm:$0xf]
    %v76 = vld [vmem:[#allocation7 + $0x38] sm:$0xf]
    %v77 = vld [vmem:[#allocation7 + $0x3c] sm:$0xf]
    %v78 = vld [vmem:[#allocation7 + $0x40] sm:$0xf]
    %v79 = vld [vmem:[#allocation7 + $0x44] sm:$0xf]
    %v80 = vld [vmem:[#allocation7 + $0x48] sm:$0xf]
    %v81 = vld [vmem:[#allocation7 + $0x4c] sm:$0xf]
    %v82 = vld [vmem:[#allocation7 + $0x50] sm:$0xf]
    %v83 = vld [vmem:[#allocation7 + $0x54] sm:$0xf]
    %v84 = vld [vmem:[#allocation7 + $0x58] sm:$0xf]
    %v85 = vld [vmem:[#allocation7 + $0x5c] sm:$0xf]
    %v86 = vld [vmem:[#allocation7 + $0x60] sm:$0xf]
    %v87 = vld [vmem:[#allocation7 + $0x64] sm:$0xf]
    %v88 = vld [vmem:[#allocation7 + $0x68] sm:$0xf]
    %v89 = vld [vmem:[#allocation7 + $0x6c] sm:$0xf]
    %v90 = vld [vmem:[#allocation7 + $0x70] sm:$0xf]
    %v91 = vld [vmem:[#allocation7 + $0x74] sm:$0xf]
    %v92 = vld [vmem:[#allocation7 + $0x78] sm:$0xf]
    %v93 = vld [vmem:[#allocation7 + $0x7c] sm:$0xf]
    %v94 = vld [vmem:[#allocation7 + $0x80] sm:$0xf]
    %v95 = vld [vmem:[#allocation7 + $0x84] sm:$0xf]
    %v96 = vld [vmem:[#allocation7 + $0x88] sm:$0xf]
    %v97 = vld [vmem:[#allocation7 + $0x8c] sm:$0xf]
    %v98 = vld [vmem:[#allocation7 + $0x90] sm:$0xf]
    %v99 = vld [vmem:[#allocation7 + $0x94] sm:$0xf]
    %v100 = vld [vmem:[#allocation7 + $0x98] sm:$0xf]
    %v101 = vld [vmem:[#allocation7 + $0x9c] sm:$0xf]
    %v102 = vld [vmem:[#allocation7 + $0xa0] sm:$0xf]
    %v103 = vld [vmem:[#allocation7 + $0xa4] sm:$0xf]
    %v104 = vld [vmem:[#allocation7 + $0xa8] sm:$0xf]
    %v105 = vld [vmem:[#allocation7 + $0xac] sm:$0xf]
    %v106 = vld [vmem:[#allocation7 + $0xb0] sm:$0xf]
    %v107 = vld [vmem:[#allocation7 + $0xb4] sm:$0xf]
    %v108 = vld [vmem:[#allocation7 + $0xb8] sm:$0xf]
    %v109 = vld [vmem:[#allocation7 + $0xbc] sm:$0xf]
    %v111 = vperm.slane %v58, 0
    %v112 = vperm.slane %v58, 1
    %v115 = vpack.c.bf16 %v111, %v111
    %v116 = vpack.c.bf16 %v112, %v112
    %v149 = vunpack.c.l.b16 %v62
    %v150 = vunpack.c.l.b16 %v63
    %v151 = vunpack.c.l.b16 %v64
    %v152 = vunpack.c.l.b16 %v65
    %v153 = vunpack.c.l.b16 %v66
    %v154 = vunpack.c.l.b16 %v67
    %v155 = vunpack.c.l.b16 %v68
    %v156 = vunpack.c.l.b16 %v69
    %v157 = vunpack.c.l.b16 %v70
    %v158 = vunpack.c.l.b16 %v71
    %v159 = vunpack.c.l.b16 %v72
    %v160 = vunpack.c.l.b16 %v73
    %v161 = vunpack.c.l.b16 %v74
    %v162 = vunpack.c.l.b16 %v75
    %v163 = vunpack.c.l.b16 %v76
    %v164 = vunpack.c.l.b16 %v77
    %v165 = vunpack.c.l.b16 %v78
    %v166 = vunpack.c.l.b16 %v79
    %v167 = vunpack.c.l.b16 %v80
    %v168 = vunpack.c.l.b16 %v81
    %v169 = vunpack.c.l.b16 %v82
    %v170 = vunpack.c.l.b16 %v83
    %v171 = vunpack.c.l.b16 %v84
    %v172 = vunpack.c.l.b16 %v85
    %v173 = vunpack.c.l.b16 %v86
    %v174 = vunpack.c.l.b16 %v87
    %v175 = vunpack.c.l.b16 %v88
    %v176 = vunpack.c.l.b16 %v89
    %v177 = vunpack.c.l.b16 %v90
    %v178 = vunpack.c.l.b16 %v91
    %v179 = vunpack.c.l.b16 %v92
    %v180 = vunpack.c.l.b16 %v93
    %v181 = vpack.c.b16 %v150, %v149
    %v182 = vpack.c.b16 %v152, %v151
    %v183 = vpack.c.b16 %v154, %v153
    %v184 = vpack.c.b16 %v156, %v155
    %v185 = vpack.c.b16 %v158, %v157
    %v186 = vpack.c.b16 %v160, %v159
    %v187 = vpack.c.b16 %v162, %v161
    %v188 = vpack.c.b16 %v164, %v163
    %v189 = vpack.c.b16 %v166, %v165
    %v190 = vpack.c.b16 %v168, %v167
    %v191 = vpack.c.b16 %v170, %v169
    %v192 = vpack.c.b16 %v172, %v171
    %v193 = vpack.c.b16 %v174, %v173
    %v194 = vpack.c.b16 %v176, %v175
    %v195 = vpack.c.b16 %v178, %v177
    %v196 = vpack.c.b16 %v180, %v179
    %213 = vmatpush.bf16.msra.mxu0 %v188
    %214 = vmatpush.bf16.msra.mxu0 %v187
    %215 = vmatpush.bf16.msra.mxu0 %v186
    %216 = vmatpush.bf16.msra.mxu0 %v185
    %217 = vmatpush.bf16.msra.mxu0 %v184
    %218 = vmatpush.bf16.msra.mxu0 %v183
    %219 = vmatpush.bf16.msra.mxu0 %v182
    %220 = vmatpush.bf16.msra.mxu0 %v181
    %221 = vmatmul.bf16.gmra.mxu0 %v115
    %v222 = vpop.f32.mrf.mxu0
    %v223 = vadd.f32 %v59, %v222
    %v224 = vpop.f32.mrf.mxu0
    %225 = vdwg.mxu0
    %226 = vmatpush.bf16.msra.mxu0 %v196
    %227 = vmatpush.bf16.msra.mxu0 %v195
    %228 = vmatpush.bf16.msra.mxu0 %v194
    %229 = vmatpush.bf16.msra.mxu0 %v193
    %230 = vmatpush.bf16.msra.mxu0 %v192
    %231 = vmatpush.bf16.msra.mxu0 %v191
    %232 = vmatpush.bf16.msra.mxu0 %v190
    %233 = vmatpush.bf16.msra.mxu0 %v189
    %234 = vmatmul.bf16.gmra.mxu0 %v116
    %v235 = vpop.f32.mrf.mxu0
    %v236 = vadd.f32 %v223, %v235
    %v237 = vpop.f32.mrf.mxu0
    %238 = vdwg.mxu0
    %v239 = vmax.f32 %v236, 0.0
    %v240 = vpack.c.bf16 %v239, %v239
    %v257 = vunpack.c.l.b16 %v94
    %v258 = vunpack.c.l.b16 %v95
    %v259 = vunpack.c.l.b16 %v96
    %v260 = vunpack.c.l.b16 %v97
    %v261 = vunpack.c.l.b16 %v98
    %v262 = vunpack.c.l.b16 %v99
    %v263 = vunpack.c.l.b16 %v100
    %v264 = vunpack.c.l.b16 %v101
    %v265 = vunpack.c.l.b16 %v102
    %v266 = vunpack.c.l.b16 %v103
    %v267 = vunpack.c.l.b16 %v104
    %v268 = vunpack.c.l.b16 %v105
    %v269 = vunpack.c.l.b16 %v106
    %v270 = vunpack.c.l.b16 %v107
    %v271 = vunpack.c.l.b16 %v108
    %v272 = vunpack.c.l.b16 %v109
    %v273 = vpack.c.b16 %v258, %v257
    %v274 = vpack.c.b16 %v260, %v259
    %v275 = vpack.c.b16 %v262, %v261
    %v276 = vpack.c.b16 %v264, %v263
    %v277 = vpack.c.b16 %v266, %v265
    %v278 = vpack.c.b16 %v268, %v267
    %v279 = vpack.c.b16 %v270, %v269
    %v280 = vpack.c.b16 %v272, %v271
    %289 = vmatpush.bf16.msra.mxu0 %v280
    %290 = vmatpush.bf16.msra.mxu0 %v279
    %291 = vmatpush.bf16.msra.mxu0 %v278
    %292 = vmatpush.bf16.msra.mxu0 %v277
    %293 = vmatpush.bf16.msra.mxu0 %v276
    %294 = vmatpush.bf16.msra.mxu0 %v275
    %295 = vmatpush.bf16.msra.mxu0 %v274
    %296 = vmatpush.bf16.msra.mxu0 %v273
    %297 = vmatmul.bf16.gmra.mxu0 %v240
    %v298 = vpop.f32.mrf.mxu0
    %v299 = vadd.f32 %v60, %v298
    %v300 = vpop.f32.mrf.mxu0
    %301 = vdwg.mxu0
    %v302 = vmax.f32 %v299, 0.0
    %303 = vxpose.xlu0.b32.start [1/16] %v302, 128
    %304 = vxpose.xlu0.b32.cont [2/16] 0.0, 128
    %305 = vxpose.xlu0.b32.cont [3/16] 0.0, 128
    %306 = vxpose.xlu0.b32.cont [4/16] 0.0, 128
    %307 = vxpose.xlu0.b32.cont [5/16] 0.0, 128
    %308 = vxpose.xlu0.b32.cont [6/16] 0.0, 128
    %309 = vxpose.xlu0.b32.cont [7/16] 0.0, 128
    %310 = vxpose.xlu0.b32.cont [8/16] 0.0, 128
    %311 = vxpose.xlu0.b32.cont [9/16] 0.0, 128
    %312 = vxpose.xlu0.b32.cont [10/16] 0.0, 128
    %313 = vxpose.xlu0.b32.cont [11/16] 0.0, 128
    %314 = vxpose.xlu0.b32.cont [12/16] 0.0, 128
    %315 = vxpose.xlu0.b32.cont [13/16] 0.0, 128
    %316 = vxpose.xlu0.b32.cont [14/16] 0.0, 128
    %317 = vxpose.xlu0.b32.cont [15/16] 0.0, 128
    %318 = vxpose.xlu0.b32.end [16/16] 0.0, 128
    %v319 = vpop.trf.xlu0
    %v320 = vpop.trf.xlu0
    %v321 = vpop.trf.xlu0
    %v322 = vpop.trf.xlu0
    %v323 = vpop.trf.xlu0
    %v324 = vpop.trf.xlu0
    %v325 = vpop.trf.xlu0
    %v326 = vpop.trf.xlu0
    %v327 = vpop.trf.xlu0
    %v328 = vpop.trf.xlu0
    %v329 = vpop.trf.xlu0
    %v330 = vpop.trf.xlu0
    %v331 = vpop.trf.xlu0
    %v332 = vpop.trf.xlu0
    %v333 = vpop.trf.xlu0
    %v334 = vpop.trf.xlu0
    %336 = vset.pattern.permute.xlu0 0
    %337 = vperm.xlu0 %336, %v319
    %v338 = vpop.permute.xlu0 %337
    %341 = vset.pattern.permute.xlu0 0
    %342 = vperm.xlu0 %341, %v320
    %v343 = vpop.permute.xlu0 %342
    %346 = vset.pattern.permute.xlu0 0
    %347 = vperm.xlu0 %346, %v321
    %v348 = vpop.permute.xlu0 %347
    %351 = vset.pattern.permute.xlu0 0
    %352 = vperm.xlu0 %351, %v322
    %v353 = vpop.permute.xlu0 %352
    %356 = vset.pattern.permute.xlu0 0
    %357 = vperm.xlu0 %356, %v323
    %v358 = vpop.permute.xlu0 %357
    %361 = vset.pattern.permute.xlu0 0
    %362 = vperm.xlu0 %361, %v324
    %v363 = vpop.permute.xlu0 %362
    %366 = vset.pattern.permute.xlu0 0
    %367 = vperm.xlu0 %366, %v325
    %v368 = vpop.permute.xlu0 %367
    %371 = vset.pattern.permute.xlu0 0
    %372 = vperm.xlu0 %371, %v326
    %v373 = vpop.permute.xlu0 %372
    %376 = vset.pattern.permute.xlu0 0
    %377 = vperm.xlu0 %376, %v327
    %v378 = vpop.permute.xlu0 %377
    %381 = vset.pattern.permute.xlu0 0
    %382 = vperm.xlu0 %381, %v328
    %v383 = vpop.permute.xlu0 %382
    %386 = vset.pattern.permute.xlu0 0
    %387 = vperm.xlu0 %386, %v329
    %v388 = vpop.permute.xlu0 %387
    %391 = vset.pattern.permute.xlu0 0
    %392 = vperm.xlu0 %391, %v330
    %v393 = vpop.permute.xlu0 %392
    %396 = vset.pattern.permute.xlu0 0
    %397 = vperm.xlu0 %396, %v331
    %v398 = vpop.permute.xlu0 %397
    %401 = vset.pattern.permute.xlu0 0
    %402 = vperm.xlu0 %401, %v332
    %v403 = vpop.permute.xlu0 %402
    %406 = vset.pattern.permute.xlu0 0
    %407 = vperm.xlu0 %406, %v333
    %v408 = vpop.permute.xlu0 %407
    %411 = vset.pattern.permute.xlu0 0
    %412 = vperm.xlu0 %411, %v334
    %v413 = vpop.permute.xlu0 %412
    %v416 = vperm.slane %v61, 0
    %v418 = vmul.f32 %v338, %v416
    %v419 = vmul.f32 %v343, %v416
    %v420 = vmul.f32 %v348, %v416
    %v421 = vmul.f32 %v353, %v416
    %v422 = vmul.f32 %v358, %v416
    %v423 = vmul.f32 %v363, %v416
    %v424 = vmul.f32 %v368, %v416
    %v425 = vmul.f32 %v373, %v416
    %v426 = vmul.f32 %v378, %v416
    %v427 = vmul.f32 %v383, %v416
    %v428 = vmul.f32 %v388, %v416
    %v429 = vmul.f32 %v393, %v416
    %v430 = vmul.f32 %v398, %v416
    %v431 = vmul.f32 %v403, %v416
    %v432 = vmul.f32 %v408, %v416
    %v433 = vmul.f32 %v413, %v416
    %434 = vst [vmem:[#allocation8] sm:$0xff] %v418
    %435 = vst [vmem:[#allocation8 + $0x8] sm:$0xff] %v419
    %436 = vst [vmem:[#allocation8 + $0x10] sm:$0xff] %v420
    %437 = vst [vmem:[#allocation8 + $0x18] sm:$0xff] %v421
    %438 = vst [vmem:[#allocation8 + $0x20] sm:$0xff] %v422
    %439 = vst [vmem:[#allocation8 + $0x28] sm:$0xff] %v423
    %440 = vst [vmem:[#allocation8 + $0x30] sm:$0xff] %v424
    %441 = vst [vmem:[#allocation8 + $0x38] sm:$0xff] %v425
    %442 = vst [vmem:[#allocation8 + $0x40] sm:$0xff] %v426
    %443 = vst [vmem:[#allocation8 + $0x48] sm:$0xff] %v427
    %444 = vst [vmem:[#allocation8 + $0x50] sm:$0xff] %v428
    %445 = vst [vmem:[#allocation8 + $0x58] sm:$0xff] %v429
    %446 = vst [vmem:[#allocation8 + $0x60] sm:$0xff] %v430
    %447 = vst [vmem:[#allocation8 + $0x68] sm:$0xff] %v431
    %448 = vst [vmem:[#allocation8 + $0x70] sm:$0xff] %v432
    %449 = vst [vmem:[#allocation8 + $0x78] sm:$0xff] %v433
    // Predicated region
    $region26: #{tpu_custom_call.1} parent=1 // pred_check
      _
    $region27: #{tpu_custom_call.1} parent=1 // pred_check_branch
      %451 = sbr.rel (0) target = $region29
    $region28: #{tpu_custom_call.1} parent=1 // pred_region
      %453 = vsyncadd [#allocation4], 0
      %s454 = sshll.u32 [#allocation8], 4
      %s455 = int_to_ptr.vmem [resolvable:$true] %s454
      %s456 = sshll.u32 %s3, 4
      %s457 = int_to_ptr.hbm [resolvable:$true] %s456
      %462 = dma.vmem_to_hbm [thread:$0]  %s455, 2048, %s457, [#allocation4], 128, 128, 8
    $region29: #{tpu_custom_call.1} parent=1 // pred_fallthru
      _
    // Predicated region
    $region30: #{tpu_custom_call.1} parent=1 // pred_check
      _
    $region31: #{tpu_custom_call.1} parent=1 // pred_check_branch
      %464 = sbr.rel (0) target = $region33
    $region32: #{tpu_custom_call.1} parent=1 // pred_region
      %466 = dma.done [#allocation4], 2048
    $region33: #{tpu_custom_call.1} parent=1 // pred_fallthru
      _
    %467 = vsyncpa [#allocation3], 1
    %468 = vsyncpa [#allocation6], 1
    %469 = vsyncpa [#allocation4], 1

</llo_original>
